<compile_context>
chip_gen: v7x
topology: tpu7x:2x2x1
jax: 0.10.0
libtpu: 0.0.40
codegen_flags: <defaults>
</compile_context>

<pallas_src>
import functools
import math

import jax
import jax.numpy as jnp
from jax.experimental import pallas as pl
from jax.experimental.pallas import tpu as pltpu


_LANE_CANDIDATES = (1024, 512, 256, 128)   # lane-dense widths (multiples of 128)
_BLOCK_BYTES = 4 * 1024 * 1024             # ~4 MiB payload per block per array
_VMEM_LIMIT_BYTES = 32 * 1024 * 1024       # 2 arrays x 2 buffers x 4 MiB = 16 MiB used


def _swish_kernel(x_ref, o_ref, *, beta):
    # x_ref / o_ref: (block_rows, lanes) VMEM tiles.
    x = x_ref[...].astype(jnp.float32)
    z = x if beta == 1.0 else x * beta
    sig = 1.0 / (1.0 + jnp.exp(-z))          # EUP exp + VPU math; safe in f32
    o_ref[...] = (x * sig).astype(o_ref.dtype)


def _round_up(v, m):
    return (v + m - 1) // m * m


def _choose_block_rows(rows, lanes, itemsize):
    """Pick a block row count: dtype-scaled byte budget, >=2 grid steps when
    possible (v7x megacore), even step count preferred, multiple of the
    sublane tile (8 f32 / 16 bf16 / 32 int8) unless it spans the full dim."""
    sub = max(8, 32 // itemsize)
    if rows <= sub:
        return rows                                     # single full-dim block
    budget = max(sub, (_BLOCK_BYTES // (lanes * itemsize)) // sub * sub)
    half = _round_up(pl.cdiv(rows, 2), sub)             # guarantee >= 2 steps
    blk = min(budget, half)
    steps = pl.cdiv(rows, blk)
    if steps > 2 and steps % 2 == 1:                    # prefer even step count
        blk2 = max(sub, _round_up(pl.cdiv(rows, steps + 1), sub))
        if pl.cdiv(rows, blk2) % 2 == 0:
            blk = blk2
    return blk


def _swish_jnp(x, beta):
    xf = x.astype(jnp.float32)
    z = xf if beta == 1.0 else xf * beta
    return (xf * (1.0 / (1.0 + jnp.exp(-z)))).astype(x.dtype)


def swish(x, beta=1.0, donate_input=False):
    """Pallas implementation of Swish.forward: x * sigmoid(beta * x).

    `beta` is a static Python float, matching the module's init-time value.
    Set `donate_input=True` only when the caller donates x (enables in-place
    output aliasing on the padding-free path).
    """
    # TODO(synk): a learnable / traced beta would need to be passed as an SMEM
    # scalar input instead of being baked in as a Python float.
    beta = float(beta)
    orig_shape = x.shape
    total = math.prod(orig_shape) if orig_shape else 1
    if total == 0:
        return x

    flat = x.reshape(total)
    main = (total // 128) * 128
    tail = total - main
    if main == 0:
        # Tiny tensor (<128 elements): not worth a kernel launch.
        return _swish_jnp(flat, beta).reshape(orig_shape)

    lanes = next(c for c in _LANE_CANDIDATES if main % c == 0)
    rows = main // lanes
    itemsize = x.dtype.itemsize
    x2 = (flat if tail == 0 else flat[:main]).reshape(rows, lanes)

    block_rows = _choose_block_rows(rows, lanes, itemsize)
    grid = (pl.cdiv(rows, block_rows),)
    kernel = functools.partial(_swish_kernel, beta=beta)
    aliases = {0: 0} if (donate_input and tail == 0) else {}

    out2 = pl.pallas_call(
        kernel,
        out_shape=jax.ShapeDtypeStruct((rows, lanes), x.dtype),
        grid_spec=pltpu.PrefetchScalarGridSpec(
            num_scalar_prefetch=0,
            grid=grid,
            in_specs=[pl.BlockSpec((block_rows, lanes), lambda i: (i, 0))],
            out_specs=pl.BlockSpec((block_rows, lanes), lambda i: (i, 0)),
        ),
        compiler_params=pltpu.CompilerParams(
            dimension_semantics=("parallel",),
            vmem_limit_bytes=_VMEM_LIMIT_BYTES,
        ),
        cost_estimate=pl.CostEstimate(
            flops=4 * main,
            transcendentals=main,
            bytes_accessed=2 * main * itemsize,
        ),
        input_output_aliases=aliases,
    )(x2)

    if tail == 0:
        return out2.reshape(orig_shape)                  # reshape is free
    # Ragged tail (<128 elements): tiny jnp op, then stitch (rare path).
    out_tail = _swish_jnp(flat[main:], beta)
    return jnp.concatenate([out2.reshape(main), out_tail]).reshape(orig_shape)


if __name__ == "__main__":
    key = jax.random.PRNGKey(0)
    x = jax.random.normal(key, (2, 4, 16, 16), dtype=jnp.float32)

    # simple swish (beta = 1.0)
    out = jax.block_until_ready(swish(x))
    ref = x * jax.nn.sigmoid(x)
    assert out.shape == x.shape and out.dtype == x.dtype
    assert jnp.allclose(out, ref, atol=1e-5, rtol=1e-5), "simple swish mismatch"

    # advanced swish (beta != 1.0)
    out_b = jax.block_until_ready(swish(x, beta=1.5))
    ref_b = x * jax.nn.sigmoid(1.5 * x)
    assert jnp.allclose(out_b, ref_b, atol=1e-5, rtol=1e-5), "advanced swish mismatch"

    # bf16 input path (compute in f32, cast the product)
    xb = x.astype(jnp.bfloat16)
    out_bf = jax.block_until_ready(swish(xb))
    xf = xb.astype(jnp.float32)
    ref_bf = (xf * jax.nn.sigmoid(xf)).astype(jnp.bfloat16)
    assert out_bf.dtype == jnp.bfloat16
    assert jnp.allclose(out_bf.astype(jnp.float32),
                        ref_bf.astype(jnp.float32), atol=5e-2), "bf16 swish mismatch"

    # multi-block path (grid > 1, partial boundary block): 4*32*28*28 = 98*1024
    xm = jax.random.normal(jax.random.PRNGKey(2), (4, 32, 28, 28), dtype=jnp.float32)
    out_m = jax.block_until_ready(swish(xm))
    ref_m = xm * jax.nn.sigmoid(xm)
    assert jnp.allclose(out_m, ref_m, atol=1e-5, rtol=1e-5), "multi-block mismatch"

    # ragged path (total % 128 != 0): kernel on aligned prefix + jnp tail
    xr = jax.random.normal(jax.random.PRNGKey(1), (3, 7, 7, 5), dtype=jnp.float32)
    out_r = jax.block_until_ready(swish(xr, beta=1.5))
    ref_r = xr * jax.nn.sigmoid(1.5 * xr)
    assert jnp.allclose(out_r, ref_r, atol=1e-5, rtol=1e-5), "ragged swish mismatch"

    print("KERNEL_OK")
</pallas_src>

<mosaic_0001>
module attributes {stable_mosaic.version = 11 : i64} {
  func.func @_swish_kernel(%arg0: i32, %arg1: memref<2x1024xf32, #tpu.memory_space<vmem>>, %arg2: memref<2x1024xf32, #tpu.memory_space<vmem>>) attributes {dimension_semantics = [#tpu.dimension_semantics<parallel>], iteration_bounds = array<i64: 1>, scalar_prefetch = 0 : i64, scratch_operands = 0 : i64, tpu.core_type = #tpu.core_type<tc>, window_params = [{transform_indices = @transform_0, window_bounds = array<i64: 2, 1024>}, {transform_indices = @transform_1, window_bounds = array<i64: 2, 1024>}]} {
    %c0 = arith.constant 0 : index
    %c0_0 = arith.constant 0 : index
    %0 = vector.load %arg1[%c0, %c0_0] : memref<2x1024xf32, #tpu.memory_space<vmem>>, vector<2x1024xf32>
    %cst = arith.constant 0.000000e+00 : f32
    %1 = vector.broadcast %cst : f32 to vector<2x1024xf32>
    %2 = arith.subf %1, %0 : vector<2x1024xf32>
    %3 = math.exp %2 : vector<2x1024xf32>
    %cst_1 = arith.constant 1.000000e+00 : f32
    %4 = vector.broadcast %cst_1 : f32 to vector<2x1024xf32>
    %5 = arith.addf %4, %3 : vector<2x1024xf32>
    %cst_2 = arith.constant 1.000000e+00 : f32
    %6 = vector.broadcast %cst_2 : f32 to vector<2x1024xf32>
    %7 = arith.divf %6, %5 : vector<2x1024xf32>
    %8 = arith.mulf %0, %7 : vector<2x1024xf32>
    %c0_3 = arith.constant 0 : index
    %c0_4 = arith.constant 0 : index
    %9 = vector.load %arg2[%c0_3, %c0_4] : memref<2x1024xf32, #tpu.memory_space<vmem>>, vector<2x1024xf32>
    tpu.vector_store %arg2[%c0_3, %c0_4], %8 {strides = array<i32>} : memref<2x1024xf32, #tpu.memory_space<vmem>>, vector<2x1024xf32>,
    return
  }
  func.func @transform_0(%arg0: i32) -> (i32, i32) {
    %c0_i32 = arith.constant 0 : i32
    %c0_i32_0 = arith.constant 0 : i32
    return %arg0, %c0_i32 : i32, i32
  }
  func.func @transform_1(%arg0: i32) -> (i32, i32) {
    %c0_i32 = arith.constant 0 : i32
    %c0_i32_0 = arith.constant 0 : i32
    return %arg0, %c0_i32 : i32, i32
  }
}

</mosaic_0001>

<llo_original>
// kernel: tpu_custom_call.1
$region0: #{tpu_custom_call.1}
  #allocation0 [shape = 'u32[]', space=smem, size = 0x4, offset = 0x4, fixed_abs, tag = 'smem constant byte address 0x4 - core index']
  #allocation1 [shape = 'u32[144,128]{1,0:T(1,128)}', space=vmem, size = 0x12000, scoped, tag = 'internal scratch']
  %s0 = inlined_call_operand.hbm [shape: f32[2,1024], index: 0, kind: input, shape index: {}]
  %s1 = inlined_call_operand.hbm [shape: f32[2,1024], index: 1, kind: output, shape index: {}]
  %s2 = sld [smem:[#allocation0]]
  $region18: #{tpu_custom_call.1} parent=0
    _
  %s4 = ssub.s32 1, %s2
  %s5 = scalar_select 0, %s4, %s2
  $region1: #{tpu_custom_call.1} parent=0
    #allocation2 [shape = 'u8[8192]{0}', space=vmem, size = 0x2000, scoped, tag = 'input window, operand 0, single buffered']
    #allocation3 [shape = 's32[1]{0}', space=sflag, size = 0x4, scoped, tag = 'scoped memory for tpu_custom_call.1']
    #allocation4 [shape = 's32[1]{0}', space=sflag, size = 0x4, scoped, tag = 'scoped memory for tpu_custom_call.1']
    #allocation5 [shape = 'u8[8192]{0}', space=vmem, size = 0x2000, scoped, tag = 'output window, operand 0, single buffered']
    %6 = vsyncpa [#allocation3], 0
    %7 = vsyncpa [#allocation4], 0
    // Predicated region
    $region2: #{tpu_custom_call.1} parent=1 // pred_check
      _
    $region3: #{tpu_custom_call.1} parent=1 // pred_check_branch
      %9 = sbr.rel (0) target = $region5
    $region4: #{tpu_custom_call.1} parent=1 // pred_region
      %s11 = ssub.s32 256, 256
      %12 = vsyncadd [#allocation3], %s11
      %s14 = sshll.u32 [#allocation2], 4
      %s15 = int_to_ptr.vmem [resolvable:$true] %s14
      %17 = dma.hbm_to_vmem [thread:$0]  %s0, 256, %s15, [#allocation3]
    $region5: #{tpu_custom_call.1} parent=1 // pred_fallthru
      _
    // Predicated region
    $region6: #{tpu_custom_call.1} parent=1 // pred_check
      _
    $region7: #{tpu_custom_call.1} parent=1 // pred_check_branch
      %19 = sbr.rel (0) target = $region9
    $region8: #{tpu_custom_call.1} parent=1 // pred_region
      %20 = dma.done [#allocation3], 256
    $region9: #{tpu_custom_call.1} parent=1 // pred_fallthru
      _
    %v21 = vld [vmem:[#allocation2] sm:$0xff]
    %v22 = vld [vmem:[#allocation2 + $0x8] sm:$0xff]
    %v23 = vsub.f32 0.0, %v21
    %v24 = vsub.f32 0.0, %v22
    %v25 = vmul.f32 %v23, 1.442695
    %v26 = vpow.pop %v25
    %v27 = vmul.f32 %v24, 1.442695
    %v28 = vpow.pop %v27
    %v29 = vadd.f32 %v26, 1.0
    %v30 = vadd.f32 %v28, 1.0
    %v31 = vrcp.pop %v29
    %v32 = vmul.f32 1.0, %v31
    %v33 = vrcp.pop %v30
    %v34 = vmul.f32 1.0, %v33
    %v35 = vmul.f32 %v21, %v32
    %v36 = vmul.f32 %v22, %v34
    %37 = vst [vmem:[#allocation5] sm:$0xff] %v35
    %38 = vst [vmem:[#allocation5 + $0x8] sm:$0xff] %v36
    // Predicated region
    $region10: #{tpu_custom_call.1} parent=1 // pred_check
      _
    $region11: #{tpu_custom_call.1} parent=1 // pred_check_branch
      %40 = sbr.rel (0) target = $region13
    $region12: #{tpu_custom_call.1} parent=1 // pred_region
      %s42 = ssub.s32 256, 256
      %43 = vsyncadd [#allocation4], %s42
      %s45 = sshll.u32 [#allocation5], 4
      %s46 = int_to_ptr.vmem [resolvable:$true] %s45
      %48 = dma.vmem_to_hbm [thread:$0]  %s46, 256, %s1, [#allocation4]
    $region13: #{tpu_custom_call.1} parent=1 // pred_fallthru
      _
    // Predicated region
    $region14: #{tpu_custom_call.1} parent=1 // pred_check
      _
    $region15: #{tpu_custom_call.1} parent=1 // pred_check_branch
      %50 = sbr.rel (0) target = $region17
    $region16: #{tpu_custom_call.1} parent=1 // pred_region
      %51 = dma.done [#allocation4], 256
    $region17: #{tpu_custom_call.1} parent=1 // pred_fallthru
      _
    %52 = vsyncpa [#allocation3], 1
    %53 = vsyncpa [#allocation4], 1

</llo_original>
